<compile_context>
chip_gen: v7x
topology: tpu7x:2x2x1
jax: 0.10.0
libtpu: 0.0.40
codegen_flags: <defaults>
</compile_context>

<pallas_src>
import jax
import jax.numpy as jnp
from jax.experimental import pallas as pl
from jax.experimental.pallas import tpu as pltpu


def _st2_kernel(w_ref, b_ref, x_ref, inp_ref, o_ref):
    # w_ref  : (2, C)  VMEM  — row 0 = gama 1x1-conv weight, row 1 = beta weight (f32)
    # b_ref  : (2,)    SMEM  — [b_gama, b_beta] (f32 scalars)
    # x_ref  : (1, C,  T) VMEM  — semantic-guidance feature tile
    # inp_ref: (1, Ci, T) VMEM  — feature tile to be modulated
    # o_ref  : (1, Ci, T) VMEM
    x = x_ref[0].astype(jnp.float32)                                   # (C, T)

    # Both 1x1 convs as a single small MXU matmul: (2, C) @ (C, T) -> (2, T).
    gb = jnp.dot(w_ref[...], x, preferred_element_type=jnp.float32)    # (2, T)
    gama = jax.nn.sigmoid(gb[0:1] + b_ref[0])                          # (1, T) f32
    beta = gb[1:2] + b_ref[1]                                          # (1, T) f32

    inp = inp_ref[0]                                                   # (Ci, T) native dtype
    # Epilogue in the input dtype (bf16 halves vreg/VALU traffic on v6e/v7x).
    gama = gama.astype(inp.dtype)
    beta = beta.astype(inp.dtype)
    o_ref[0] = (gama * inp + beta).astype(o_ref.dtype)                 # sublane broadcast


def _choose_lane_tile(hw, c, ci):
    """Largest lane tile T (multiple of 128) whose double-buffered f32 working set
    2*(C + 2*Ci)*T*4 bytes stays within ~24 MiB (comfortable on v7x's 64 MiB VMEM;
    plenty of headroom on v5e/v6e). Returns the full HW when it already fits."""
    budget = 24 * 1024 * 1024
    per_lane = 2 * (c + 2 * ci) * 4
    cap = (budget // per_lane) // 128 * 128
    cap = max(128, min(4096, cap))   # 4096 is a good default; sweep upward on v5e/v6e
    if hw <= cap:
        return hw                    # full last dim: allowed even if not a multiple of 128
    return cap


def semantic_transformation2(x, inp, w_gama, b_gama, w_beta, b_beta):
    """x: (N, C, H, W), inp: (N, Ci, H, W). Returns sigmoid(conv1x1(x))*inp + conv1x1(x)."""
    N, C, H, W = x.shape
    Ni, Ci, Hi, Wi = inp.shape
    assert (N, H, W) == (Ni, Hi, Wi)
    HW = H * W

    x_f = x.reshape(N, C, HW)
    inp_f = inp.reshape(N, Ci, HW)

    # PyTorch conv weights (1, C, 1, 1) -> fused (2, C) matrix; biases -> (2,) SMEM array.
    w2 = jnp.concatenate(
        [w_gama.reshape(1, C), w_beta.reshape(1, C)], axis=0
    ).astype(jnp.float32)
    b2 = jnp.concatenate(
        [b_gama.reshape(1), b_beta.reshape(1)], axis=0
    ).astype(jnp.float32)

    T = _choose_lane_tile(HW, C, Ci)
    grid = (N, pl.cdiv(HW, T))

    out = pl.pallas_call(
        _st2_kernel,
        out_shape=jax.ShapeDtypeStruct((N, Ci, HW), inp.dtype),
        grid_spec=pltpu.PrefetchScalarGridSpec(
            num_scalar_prefetch=0,
            grid=grid,
            in_specs=[
                pl.BlockSpec((2, C), lambda n, t: (0, 0)),            # fused conv weights
                pl.BlockSpec(memory_space=pltpu.MemorySpace.SMEM),    # fused biases (scalars)
                pl.BlockSpec((1, C, T), lambda n, t: (n, 0, t)),      # x tile
                pl.BlockSpec((1, Ci, T), lambda n, t: (n, 0, t)),     # input tile
            ],
            out_specs=pl.BlockSpec((1, Ci, T), lambda n, t: (n, 0, t)),
        ),
        compiler_params=pltpu.CompilerParams(
            # Both axes independent -> v7x megacore shards them; no-op on v5e/v6e.
            dimension_semantics=("parallel", "parallel"),
            # Default scoped VMEM (16 MiB v5e / 32 MiB v6e-v7x) would squeeze the
            # double-buffered lane tiles; 48 MiB stays under v7x's 64 MiB physical.
            vmem_limit_bytes=48 * 1024 * 1024,
        ),
        # TODO(synk): add input_output_aliases={3: 0} when callers don't reuse `inp`.
    )(w2, b2, x_f, inp_f)

    return out.reshape(N, Ci, H, W)


def _reference(x, inp, w_gama, b_gama, w_beta, b_beta):
    # Pure-JAX reference of the PyTorch forward (1x1 convs as einsum).
    wg = w_gama.reshape(-1)  # (C,)
    wb = w_beta.reshape(-1)
    gama = jax.nn.sigmoid(jnp.einsum("nchw,c->nhw", x, wg) + b_gama.reshape(()))
    beta = jnp.einsum("nchw,c->nhw", x, wb) + b_beta.reshape(())
    return gama[:, None, :, :] * inp + beta[:, None, :, :]


if __name__ == "__main__":
    key = jax.random.PRNGKey(0)
    keys = jax.random.split(key, 8)

    # Deterministic synthetic parameters (PyTorch shapes: weight (1, C, 1, 1), bias (1,)).
    C = 4
    w_gama = jax.random.normal(keys[2], (1, C, 1, 1), dtype=jnp.float32) * 0.1
    b_gama = jax.random.normal(keys[3], (1,), dtype=jnp.float32) * 0.1
    w_beta = jax.random.normal(keys[4], (1, C, 1, 1), dtype=jnp.float32) * 0.1
    b_beta = jax.random.normal(keys[5], (1,), dtype=jnp.float32) * 0.1

    # Case 1: module-sized small shapes (inChannels=4, 16x16 spatial) -> single lane tile.
    N, H, W = 2, 16, 16
    x = jax.random.normal(keys[0], (N, C, H, W), dtype=jnp.float32)
    inp = jax.random.normal(keys[1], (N, C, H, W), dtype=jnp.float32)
    out = jax.block_until_ready(
        semantic_transformation2(x, inp, w_gama, b_gama, w_beta, b_beta))
    ref = _reference(x, inp, w_gama, b_gama, w_beta, b_beta)
    assert out.shape == ref.shape
    assert jnp.allclose(out, ref, atol=1e-5, rtol=1e-5), "case 1 mismatch vs reference"

    # Case 2: exercises HW tiling with a partial last lane tile and Ci != C.
    N2, Ci2, H2, W2 = 1, 8, 80, 80   # HW = 6400 -> lane tiles of 4096 + partial 2304
    x2 = jax.random.normal(keys[6], (N2, C, H2, W2), dtype=jnp.float32)
    inp2 = jax.random.normal(keys[7], (N2, Ci2, H2, W2), dtype=jnp.float32)
    out2 = jax.block_until_ready(
        semantic_transformation2(x2, inp2, w_gama, b_gama, w_beta, b_beta))
    ref2 = _reference(x2, inp2, w_gama, b_gama, w_beta, b_beta)
    assert out2.shape == ref2.shape
    assert jnp.allclose(out2, ref2, atol=1e-5, rtol=1e-5), "case 2 mismatch vs reference"

    print("KERNEL_OK")
</pallas_src>

<mosaic_0001>
module attributes {stable_mosaic.version = 11 : i64} {
  func.func @_st2_kernel(%arg0: i32, %arg1: i32, %arg2: memref<2x4xf32, #tpu.memory_space<vmem>>, %arg3: memref<2xf32, #tpu.memory_space<smem>>, %arg4: memref<1x4x256xf32, #tpu.memory_space<vmem>>, %arg5: memref<1x4x256xf32, #tpu.memory_space<vmem>>, %arg6: memref<1x4x256xf32, #tpu.memory_space<vmem>>) attributes {dimension_semantics = [#tpu.dimension_semantics<parallel>, #tpu.dimension_semantics<parallel>], iteration_bounds = array<i64: 2, 1>, scalar_prefetch = 0 : i64, scratch_operands = 0 : i64, tpu.core_type = #tpu.core_type<tc>, window_params = [{pipeline_mode = #tpu.pipeline_mode<synchronous>, transform_indices = @transform_0, window_bounds = array<i64: 2, 4>}, {transform_indices = @transform_1, window_bounds = array<i64: 2>}, {transform_indices = @transform_2, window_bounds = array<i64: 1, 4, 256>}, {transform_indices = @transform_3, window_bounds = array<i64: 1, 4, 256>}, {transform_indices = @transform_4, window_bounds = array<i64: 1, 4, 256>}]} {
    %c0 = arith.constant 0 : index
    %c0_0 = arith.constant 0 : index
    %c0_1 = arith.constant 0 : index
    %0 = vector.load %arg4[%c0, %c0_0, %c0_1] : memref<1x4x256xf32, #tpu.memory_space<vmem>>, vector<1x4x256xf32>
    %1 = vector.shape_cast %0 : vector<1x4x256xf32> to vector<4x256xf32>
    %c0_2 = arith.constant 0 : index
    %c0_3 = arith.constant 0 : index
    %2 = vector.load %arg2[%c0_2, %c0_3] : memref<2x4xf32, #tpu.memory_space<vmem>>, vector<2x4xf32>
    %cst = arith.constant dense<0.000000e+00> : vector<2x256xf32>
    %3 = tpu.matmul %2, %1, %cst {dimension_numbers = #tpu.dot_dimension_numbers<[1], [0], [0], [1], [0, 0, 1, 1], [], []>} : vector<2x4xf32>, vector<4x256xf32>, vector<2x256xf32> -> vector<2x256xf32>
    %4 = vector.extract_strided_slice %3 {offsets = [0, 0], sizes = [1, 256], strides = [1, 1]} : vector<2x256xf32> to vector<1x256xf32>
    %c0_4 = arith.constant 0 : index
    %5 = memref.load %arg3[%c0_4] : memref<2xf32, #tpu.memory_space<smem>>
    %6 = vector.broadcast %5 : f32 to vector<1x256xf32>
    %7 = arith.addf %4, %6 : vector<1x256xf32>
    %8 = arith.negf %7 : vector<1x256xf32>
    %9 = math.exp %8 : vector<1x256xf32>
    %cst_5 = arith.constant 1.000000e+00 : f32
    %10 = vector.broadcast %cst_5 : f32 to vector<1x256xf32>
    %11 = arith.addf %10, %9 : vector<1x256xf32>
    %12 = arith.divf %10, %11 : vector<1x256xf32>
    %13 = vector.extract_strided_slice %3 {offsets = [1, 0], sizes = [1, 256], strides = [1, 1]} : vector<2x256xf32> to vector<1x256xf32>
    %c1 = arith.constant 1 : index
    %14 = memref.load %arg3[%c1] : memref<2xf32, #tpu.memory_space<smem>>
    %15 = vector.broadcast %14 : f32 to vector<1x256xf32>
    %16 = arith.addf %13, %15 : vector<1x256xf32>
    %c0_6 = arith.constant 0 : index
    %c0_7 = arith.constant 0 : index
    %c0_8 = arith.constant 0 : index
    %17 = vector.load %arg5[%c0_6, %c0_7, %c0_8] : memref<1x4x256xf32, #tpu.memory_space<vmem>>, vector<1x4x256xf32>
    %18 = vector.shape_cast %17 : vector<1x4x256xf32> to vector<4x256xf32>
    %19 = vector.broadcast %12 : vector<1x256xf32> to vector<4x256xf32>
    %20 = arith.mulf %19, %18 : vector<4x256xf32>
    %21 = vector.broadcast %16 : vector<1x256xf32> to vector<4x256xf32>
    %22 = arith.addf %20, %21 : vector<4x256xf32>
    %c0_9 = arith.constant 0 : index
    %c0_10 = arith.constant 0 : index
    %c0_11 = arith.constant 0 : index
    %23 = vector.load %arg6[%c0_9, %c0_10, %c0_11] : memref<1x4x256xf32, #tpu.memory_space<vmem>>, vector<1x4x256xf32>
    %24 = vector.shape_cast %23 : vector<1x4x256xf32> to vector<4x256xf32>
    %25 = vector.shape_cast %22 : vector<4x256xf32> to vector<1x4x256xf32>
    tpu.vector_store %arg6[%c0_9, %c0_10, %c0_11], %25 {strides = array<i32>} : memref<1x4x256xf32, #tpu.memory_space<vmem>>, vector<1x4x256xf32>,
    return
  }
  func.func @transform_0(%arg0: i32, %arg1: i32) -> (i32, i32) {
    %c0_i32 = arith.constant 0 : i32
    %c0_i32_0 = arith.constant 0 : i32
    %c0_i32_1 = arith.constant 0 : i32
    return %c0_i32, %c0_i32_0 : i32, i32
  }
  func.func @transform_1(%arg0: i32, %arg1: i32) -> i32 {
    %c0_i32 = arith.constant 0 : i32
    %c0_i32_0 = arith.constant 0 : i32
    return %c0_i32 : i32
  }
  func.func @transform_2(%arg0: i32, %arg1: i32) -> (i32, i32, i32) {
    %c0_i32 = arith.constant 0 : i32
    %c0_i32_0 = arith.constant 0 : i32
    return %arg0, %c0_i32, %arg1 : i32, i32, i32
  }
  func.func @transform_3(%arg0: i32, %arg1: i32) -> (i32, i32, i32) {
    %c0_i32 = arith.constant 0 : i32
    %c0_i32_0 = arith.constant 0 : i32
    return %arg0, %c0_i32, %arg1 : i32, i32, i32
  }
  func.func @transform_4(%arg0: i32, %arg1: i32) -> (i32, i32, i32) {
    %c0_i32 = arith.constant 0 : i32
    %c0_i32_0 = arith.constant 0 : i32
    return %arg0, %c0_i32, %arg1 : i32, i32, i32
  }
}

</mosaic_0001>

<llo_original>
// kernel: tpu_custom_call.1
$region0: #{tpu_custom_call.1}
  #allocation0 [shape = 'u32[]', space=smem, size = 0x4, offset = 0x4, fixed_abs, tag = 'smem constant byte address 0x4 - core index']
  #allocation1 [shape = 'u32[144,128]{1,0:T(1,128)}', space=vmem, size = 0x12000, scoped, tag = 'internal scratch']
  %s0 = inlined_call_operand.hbm [shape: f32[2,4], index: 0, kind: input, shape index: {}]
  %s1 = inlined_call_operand.vmem [shape: f32[2], index: 1, kind: input, shape index: {}]
  %s2 = inlined_call_operand.hbm [shape: f32[2,4,256], index: 2, kind: input, shape index: {}]
  %s3 = inlined_call_operand.hbm [shape: f32[2,4,256], index: 3, kind: input, shape index: {}]
  %s4 = inlined_call_operand.hbm [shape: f32[2,4,256], index: 4, kind: output, shape index: {}]
  %s5 = sld [smem:[#allocation0]]
  $region65: #{tpu_custom_call.1} parent=0
    _
  %s7 = ssub.s32 1, %s5
  %s8 = scalar_select 0, %s7, %s5
  $region1: #{tpu_custom_call.1} parent=0
    #allocation2 [shape = 'u8[1024]{0}', space=vmem, size = 0x400, scoped, tag = 'input window, operand 0, single buffered']
    #allocation3 [shape = 's32[2]{0}', space=sflag, size = 0x8, scoped, tag = 'scoped memory for tpu_custom_call.1']
    #allocation4 [shape = 's32[2]{0}', space=sflag, size = 0x8, scoped, tag = 'scoped memory for tpu_custom_call.1']
    #allocation5 [shape = 's32[2]{0}', space=sflag, size = 0x8, scoped, tag = 'scoped memory for tpu_custom_call.1']
    #allocation6 [shape = 'u8[512]{0}', space=smem, size = 0x200, scoped, tag = 'input window, operand 1, single buffered']
    #allocation7 [shape = 'u8[8192]{0}', space=vmem, size = 0x2000, scoped, tag = 'input window, operand 2']
    #allocation8 [shape = 's32[2]{0}', space=sflag, size = 0x8, scoped, tag = 'scoped memory for tpu_custom_call.1']
    #allocation9 [shape = 'u8[8192]{0}', space=vmem, size = 0x2000, scoped, tag = 'input window, operand 3']
    #allocation10 [shape = 'u8[8192]{0}', space=vmem, size = 0x2000, scoped, tag = 'output window, operand 0']
    %9 = vsyncpa [#allocation3], 0
    %10 = vsyncpa [#allocation5], 0
    %11 = vsyncpa [#allocation8], 0
    %s12 = scalar_lea.sflag [#allocation8], 1
    %13 = vsyncpa %s12, 0
    %14 = vsyncpa [#allocation4], 0
    %s15 = scalar_lea.sflag [#allocation4], 1
    %16 = vsyncpa %s15, 0
    loop: start=0, step=1, limit=4
    $region2: #{tpu_custom_call.1} parent=1 // loop_pre_header
      _
    $region3: #{tpu_custom_call.1} parent=1 // loop_header
      %s18 = sphi 0, %s22
      %p19 = scmp.ge.s32.totalorder %s18, 4
      %s25 = sphi 0, %s37
      %s26 = sphi 0, %s33
      %s27 = sphi 0, %s25
      %s28 = sphi 0, %s26
      %s29 = sphi 0, %s27
      %s30 = sphi 0, %s28
      %s38 = sphi 0, %s38
      %s40 = sphi 0, %s38
      %s41 = sphi 0, %s40
      %s55 = sphi 0, %s41
      %s59 = sphi 0, %s59
      %s61 = sphi 0, %s59
      %s62 = sphi 0, %s61
      %s76 = sphi 0, %s62
      %s84 = sphi 0, %s86
      %s87 = sphi 0, %s84
      %s88 = sphi 0, %s87
      %s104 = sphi 0, %s88
      %s112 = sphi 0, %s114
      %s115 = sphi 0, %s112
      %s116 = sphi 0, %s115
      %s132 = sphi 0, %s116
      %s140 = sphi 0, %s142
      %s143 = sphi 0, %s140
      %s144 = sphi 0, %s143
      %s160 = sphi 0, %s144
    $region4: #{tpu_custom_call.1} parent=1 // loop_header_branch
      %21 = sbr.rel (%p19) target = $region8
    $region5: #{tpu_custom_call.1} parent=1 // loop_body
      %s23 = ssub.s32 %s18, 1
      %s24 = ssub.s32 %s18, 2
      %s31 = sadd.s32 1, %s26
      %p32 = scmp.ge.s32.totalorder %s31, 1
      %s33 = scalar_select %p32, 0, %s31
      %s34 = sadd.s32 1, %s25
      %s35 = scalar_select %p32, %s34, %s25
      %p36 = scmp.ge.s32.totalorder %s35, 2
      %s37 = scalar_select %p36, 0, %s35
      %s39 = sadd.s32 %s38, 1
      %p42 = scmp.eq.s32.totalorder %s18, 1
      %p43 = scmp.ne.s32.totalorder %s38, %s40
      %p44 = scmp.eq.s32.totalorder %s18, 0
      %p45 = por %p43, %p44
      %p46 = scmp.ne.s32.totalorder %s38, %s40
      %p47 = scmp.eq.s32.totalorder %s23, 1
      %p48 = por %p46, %p47
      %p49 = scmp.ne.s32.totalorder %s40, %s41
      %p50 = scmp.eq.s32.totalorder %s23, 0
      %p51 = por %p49, %p50
      %p52 = scmp.ne.s32.totalorder %s40, %s41
      %p53 = scmp.eq.s32.totalorder %s24, 1
      %p54 = por %p52, %p53
      %p56 = scmp.ne.s32.totalorder %s41, %s55
      %p57 = scmp.eq.s32.totalorder %s24, 0
      %p58 = por %p56, %p57
      %s60 = sadd.s32 %s59, 1
      %p63 = scmp.eq.s32.totalorder %s18, 1
      %p64 = scmp.ne.s32.totalorder %s59, %s61
      %p65 = scmp.eq.s32.totalorder %s18, 0
      %p66 = por %p64, %p65
      %p67 = scmp.ne.s32.totalorder %s59, %s61
      %p68 = scmp.eq.s32.totalorder %s23, 1
      %p69 = por %p67, %p68
      %p70 = scmp.ne.s32.totalorder %s61, %s62
      %p71 = scmp.eq.s32.totalorder %s23, 0
      %p72 = por %p70, %p71
      %p73 = scmp.ne.s32.totalorder %s61, %s62
      %p74 = scmp.eq.s32.totalorder %s24, 1
      %p75 = por %p73, %p74
      %p77 = scmp.ne.s32.totalorder %s62, %s76
      %p78 = scmp.eq.s32.totalorder %s24, 0
      %p79 = por %p77, %p78
      %s80 = ssub.s32 %s25, %s37
      %s81 = ssub.s32 %s26, %s33
      %s82 = sor.u32 %s80, %s81
      %p83 = scmp.eq.s32.totalorder %s82, 0
      %s85 = sadd.s32 %s84, 1
      %s86 = scalar_select %p83, %s84, %s85
      %p89 = pneg %p83
      %p90 = scmp.eq.s32.totalorder %s18, 1
      %p91 = por %p89, %p90
      %p92 = scmp.ne.s32.totalorder %s84, %s87
      %p93 = scmp.eq.s32.totalorder %s18, 0
      %p94 = por %p92, %p93
      %p95 = scmp.ne.s32.totalorder %s84, %s87
      %p96 = scmp.eq.s32.totalorder %s23, 1
      %p97 = por %p95, %p96
      %p98 = scmp.ne.s32.totalorder %s87, %s88
      %p99 = scmp.eq.s32.totalorder %s23, 0
      %p100 = por %p98, %p99
      %p101 = scmp.ne.s32.totalorder %s87, %s88
      %p102 = scmp.eq.s32.totalorder %s24, 1
      %p103 = por %p101, %p102
      %p105 = scmp.ne.s32.totalorder %s88, %s104
      %p106 = scmp.eq.s32.totalorder %s24, 0
      %p107 = por %p105, %p106
      %s108 = ssub.s32 %s25, %s37
      %s109 = ssub.s32 %s26, %s33
      %s110 = sor.u32 %s108, %s109
      %p111 = scmp.eq.s32.totalorder %s110, 0
      %s113 = sadd.s32 %s112, 1
      %s114 = scalar_select %p111, %s112, %s113
      %p117 = pneg %p111
      %p118 = scmp.eq.s32.totalorder %s18, 1
      %p119 = por %p117, %p118
      %p120 = scmp.ne.s32.totalorder %s112, %s115
      %p121 = scmp.eq.s32.totalorder %s18, 0
      %p122 = por %p120, %p121
      %p123 = scmp.ne.s32.totalorder %s112, %s115
      %p124 = scmp.eq.s32.totalorder %s23, 1
      %p125 = por %p123, %p124
      %p126 = scmp.ne.s32.totalorder %s115, %s116
      %p127 = scmp.eq.s32.totalorder %s23, 0
      %p128 = por %p126, %p127
      %p129 = scmp.ne.s32.totalorder %s115, %s116
      %p130 = scmp.eq.s32.totalorder %s24, 1
      %p131 = por %p129, %p130
      %p133 = scmp.ne.s32.totalorder %s116, %s132
      %p134 = scmp.eq.s32.totalorder %s24, 0
      %p135 = por %p133, %p134
      %s136 = ssub.s32 %s25, %s37
      %s137 = ssub.s32 %s26, %s33
      %s138 = sor.u32 %s136, %s137
      %p139 = scmp.eq.s32.totalorder %s138, 0
      %s141 = sadd.s32 %s140, 1
      %s142 = scalar_select %p139, %s140, %s141
      %p145 = pneg %p139
      %p146 = scmp.eq.s32.totalorder %s18, 1
      %p147 = por %p145, %p146
      %p148 = scmp.ne.s32.totalorder %s140, %s143
      %p149 = scmp.eq.s32.totalorder %s18, 0
      %p150 = por %p148, %p149
      %p151 = scmp.ne.s32.totalorder %s140, %s143
      %p152 = scmp.eq.s32.totalorder %s23, 1
      %p153 = por %p151, %p152
      %p154 = scmp.ne.s32.totalorder %s143, %s144
      %p155 = scmp.eq.s32.totalorder %s23, 0
      %p156 = por %p154, %p155
      %p157 = scmp.ne.s32.totalorder %s143, %s144
      %p158 = scmp.eq.s32.totalorder %s24, 1
      %p159 = por %p157, %p158
      %p161 = scmp.ne.s32.totalorder %s144, %s160
      %p162 = scmp.eq.s32.totalorder %s24, 0
      %p163 = por %p161, %p162
      %p164 = scmp.le.s32.totalorder 1, %s18
      %p165 = scmp.lt.s32.totalorder %s18, 3
      %p166 = pnand %p164, %p165
      %p167 = pneg %p166
      // Predicated region
      $region9: #{tpu_custom_call.1} parent=5 // pred_check
        _
      $region10: #{tpu_custom_call.1} parent=5 // pred_check_branch
        %169 = sbr.rel (%p166) target = $region12
      $region11: #{tpu_custom_call.1} parent=5 // pred_region
        %s170 = ssub.s32 %s18, 1
        // Predicated region
        $region13: #{tpu_custom_call.1} parent=11 // pred_check
          %p171 = pneg %p51
        $region14: #{tpu_custom_call.1} parent=11 // pred_check_branch
          %173 = sbr.rel (%p171) target = $region16
        $region15: #{tpu_custom_call.1} parent=11 // pred_region
          %s175 = ssub.s32 32, 32
          %176 = vsyncadd [#allocation3], %s175
          %s178 = sshll.u32 [#allocation2], 4
          %s179 = int_to_ptr.vmem [resolvable:$true] %s178
          %181 = dma.hbm_to_vmem [thread:$0]  %s0, 32, %s179, [#allocation3]
        $region16: #{tpu_custom_call.1} parent=11 // pred_fallthru
          _
        // Predicated region
        $region17: #{tpu_custom_call.1} parent=11 // pred_check
          %p182 = pneg %p72
        $region18: #{tpu_custom_call.1} parent=11 // pred_check_branch
          %184 = sbr.rel (%p182) target = $region20
        $region19: #{tpu_custom_call.1} parent=11 // pred_region
          %s186 = ssub.s32 16, 16
          %187 = vsyncadd [#allocation5], %s186
          %s189 = sshll.u32 %s1, 4
          %s190 = int_to_ptr.vmem [resolvable:$true] %s189
          %192 = dma.vmem_to_smem %s190, 16, [#allocation6], [#allocation5]
        $region20: #{tpu_custom_call.1} parent=11 // pred_fallthru
          _
      $region12: #{tpu_custom_call.1} parent=5 // pred_fallthru
        _
      %p193 = scmp.lt.s32.totalorder %s18, 2
      // Predicated region
      $region21: #{tpu_custom_call.1} parent=5 // pred_check
        %p194 = pneg %p193
      $region22: #{tpu_custom_call.1} parent=5 // pred_check_branch
        %196 = sbr.rel (%p194) target = $region24
      $region23: #{tpu_custom_call.1} parent=5 // pred_region
        // Predicated region
        $region25: #{tpu_custom_call.1} parent=23 // pred_check
          %p197 = pneg %p94
        $region26: #{tpu_custom_call.1} parent=23 // pred_check_branch
          %199 = sbr.rel (%p197) target = $region28
        $region27: #{tpu_custom_call.1} parent=23 // pred_region
          %s200 = sand.u32 %s18, 1
          %s201 = scalar_lea.sflag [#allocation8], %s200
          %s202 = sand.u32 %s84, 1
          %s203 = smul.addr %s202, 8
          %s204 = scalar_lea.vmem [#allocation7], %s203
          %s205 = smul.u32 2, %s26
          %s207 = ssub.s32 128, 128
          %208 = vsyncadd %s201, %s207
          %s209 = smul.addr %s25, 2
          %s210 = sadd.s32 %s205, %s209
          %s211 = smul.addr %s210, 64
          %s212 = scalar_lea.hbm %s2, %s211
          %s214 = sshll.u32 %s204, 4
          %s215 = int_to_ptr.vmem [resolvable:$true] %s214
          %217 = dma.hbm_to_vmem [thread:$0]  %s212, 128, %s215, %s201
        $region28: #{tpu_custom_call.1} parent=23 // pred_fallthru
          _
        // Predicated region
        $region29: #{tpu_custom_call.1} parent=23 // pred_check
          %p218 = pneg %p122
        $region30: #{tpu_custom_call.1} parent=23 // pred_check_branch
          %220 = sbr.rel (%p218) target = $region32
        $region31: #{tpu_custom_call.1} parent=23 // pred_region
          %s221 = sand.u32 %s18, 1
          %s222 = scalar_lea.sflag [#allocation8], %s221
          %s223 = sand.u32 %s112, 1
          %s224 = smul.addr %s223, 8
          %s225 = scalar_lea.vmem [#allocation9], %s224
          %s226 = smul.u32 2, %s26
          %s228 = ssub.s32 128, 128
          %229 = vsyncadd %s222, %s228
          %s230 = smul.addr %s25, 2
          %s231 = sadd.s32 %s226, %s230
          %s232 = smul.addr %s231, 64
          %s233 = scalar_lea.hbm %s3, %s232
          %s235 = sshll.u32 %s225, 4
          %s236 = int_to_ptr.vmem [resolvable:$true] %s235
          %238 = dma.hbm_to_vmem [thread:$0]  %s233, 128, %s236, %s222
        $region32: #{tpu_custom_call.1} parent=23 // pred_fallthru
          _
      $region24: #{tpu_custom_call.1} parent=5 // pred_fallthru
        _
      %p239 = scmp.le.s32.totalorder 1, %s18
      %p240 = scmp.lt.s32.totalorder %s18, 3
      %p241 = pnand %p239, %p240
      %p242 = pneg %p241
      // Predicated region
      $region33: #{tpu_custom_call.1} parent=5 // pred_check
        _
      $region34: #{tpu_custom_call.1} parent=5 // pred_check_branch
        %244 = sbr.rel (%p241) target = $region36
      $region35: #{tpu_custom_call.1} parent=5 // pred_region
        %s245 = ssub.s32 %s18, 1
        // Predicated region
        $region37: #{tpu_custom_call.1} parent=35 // pred_check
          %p246 = pneg %p51
        $region38: #{tpu_custom_call.1} parent=35 // pred_check_branch
          %248 = sbr.rel (%p246) target = $region40
        $region39: #{tpu_custom_call.1} parent=35 // pred_region
          %249 = dma.done [#allocation3], 32
        $region40: #{tpu_custom_call.1} parent=35 // pred_fallthru
          _
        // Predicated region
        $region41: #{tpu_custom_call.1} parent=35 // pred_check
          %p250 = pneg %p72
        $region42: #{tpu_custom_call.1} parent=35 // pred_check_branch
          %252 = sbr.rel (%p250) target = $region44
        $region43: #{tpu_custom_call.1} parent=35 // pred_region
          %253 = dma.done [#allocation5], 16
        $region44: #{tpu_custom_call.1} parent=35 // pred_fallthru
          _
        %s254 = sand.u32 %s23, 1
        %s255 = scalar_lea.sflag [#allocation8], %s254
        %s256 = sand.u32 %s87, 1
        %s257 = smul.addr %s256, 8
        %s258 = scalar_lea.vmem [#allocation7], %s257
        // Predicated region
        $region45: #{tpu_custom_call.1} parent=35 // pred_check
          %p259 = pneg %p100
        $region46: #{tpu_custom_call.1} parent=35 // pred_check_branch
          %261 = sbr.rel (%p259) target = $region48
        $region47: #{tpu_custom_call.1} parent=35 // pred_region
          %262 = dma.done %s255, 128
        $region48: #{tpu_custom_call.1} parent=35 // pred_fallthru
          _
        %s263 = sand.u32 %s23, 1
        %s264 = scalar_lea.sflag [#allocation8], %s263
        %s265 = sand.u32 %s115, 1
        %s266 = smul.addr %s265, 8
        %s267 = scalar_lea.vmem [#allocation9], %s266
        // Predicated region
        $region49: #{tpu_custom_call.1} parent=35 // pred_check
          %p268 = pneg %p128
        $region50: #{tpu_custom_call.1} parent=35 // pred_check_branch
          %270 = sbr.rel (%p268) target = $region52
        $region51: #{tpu_custom_call.1} parent=35 // pred_region
          %271 = dma.done %s264, 128
        $region52: #{tpu_custom_call.1} parent=35 // pred_fallthru
          _
        %272 = sfence
        %p273 = pneg %p51
        %p274 = pneg %p48
        %p275 = pneg %p72
        %p276 = pneg %p69
        %s277 = sand.u32 %s23, 1
        %s278 = scalar_lea.sflag [#allocation8], %s277
        %s279 = sand.u32 %s87, 1
        %s280 = smul.addr %s279, 8
        %s281 = scalar_lea.vmem [#allocation7], %s280
        %p282 = pneg %p100
        %p283 = pneg %p97
        %s284 = sand.u32 %s23, 1
        %s285 = scalar_lea.sflag [#allocation8], %s284
        %s286 = sand.u32 %s115, 1
        %s287 = smul.addr %s286, 8
        %s288 = scalar_lea.vmem [#allocation9], %s287
        %p289 = pneg %p128
        %p290 = pneg %p125
        %p291 = pneg %p156
        %p292 = pneg %p153
        %s293 = sand.u32 %s143, 1
        %s294 = scalar_lea.sflag [#allocation4], %s293
        %s295 = sand.u32 %s143, 1
        %s296 = smul.addr %s295, 8
        %s297 = scalar_lea.vmem [#allocation10], %s296
        %s298 = smul.u32 2, %s28
        %s299 = smul.u32 2, %s28
        %s300 = smul.u32 2, %s28
        %v301 = vld [vmem:[%s258] sm:$0xff]
        %v302 = vld [vmem:[#allocation2] sm:$0x3]
        %v304 = vcombine.high %v301, %v301
        %vm305 = vcmask 31744
        %v307 = vsel %vm305, %v302, 0
        %vm309 = vcmask 1043456
        %v310 = vsel %vm309, %v301, 0
        %v312 = vsel %vm309, %v304, 0
        %314 = vmatprep.subr.mxu0 %v312
        %315 = vmatpush1.msra.mxu0 %v310
        %316 = vmatprep.subr.mxu0 0.0
        %317 = vmatpush1.msra.mxu0 0.0
        %318 = vmatprep.subr.mxu0 0.0
        %319 = vmatpush1.msra.mxu0 0.0
        %320 = vmatprep.subr.mxu0 0.0
        %321 = vmatpush1.msra.mxu0 0.0
        %322 = vmatprep.subr.mxu0 0.0
        %323 = vmatpush1.msra.mxu0 0.0
        %324 = vmatprep.subr.mxu0 0.0
        %325 = vmatpush1.msra.mxu0 0.0
        %326 = vmatprep.subr.mxu0 0.0
        %327 = vmatpush1.msra.mxu0 0.0
        %328 = vmatprep.subr.mxu0 0.0
        %329 = vmatpush1.msra.mxu0 0.0
        %330 = vmatprep.subr.mxu0 0.0
        %331 = vmatpush1.msra.mxu0 0.0
        %332 = vmatprep.subr.mxu0 0.0
        %333 = vmatpush1.msra.mxu0 0.0
        %334 = vmatprep.subr.mxu0 0.0
        %335 = vmatpush1.msra.mxu0 0.0
        %336 = vmatprep.subr.mxu0 0.0
        %337 = vmatpush1.msra.mxu0 0.0
        %338 = vmatprep.subr.mxu0 0.0
        %339 = vmatpush1.msra.mxu0 0.0
        %340 = vmatprep.subr.mxu0 0.0
        %341 = vmatpush1.msra.mxu0 0.0
        %342 = vmatprep.subr.mxu0 0.0
        %343 = vmatpush1.msra.mxu0 0.0
        %344 = vmatprep.subr.mxu0 0.0
        %345 = vmatpush1.msra.mxu0 0.0
        %346 = vmatprep.subr.mxu0 0.0
        %347 = vmatpush1.msra.mxu0 0.0
        %348 = vmatprep.subr.mxu0 0.0
        %349 = vmatpush1.msra.mxu0 0.0
        %350 = vmatprep.subr.mxu0 0.0
        %351 = vmatpush1.msra.mxu0 0.0
        %352 = vmatprep.subr.mxu0 0.0
        %353 = vmatpush1.msra.mxu0 0.0
        %354 = vmatprep.subr.mxu0 0.0
        %355 = vmatpush1.msra.mxu0 0.0
        %356 = vmatprep.subr.mxu0 0.0
        %357 = vmatpush1.msra.mxu0 0.0
        %358 = vmatprep.subr.mxu0 0.0
        %359 = vmatpush1.msra.mxu0 0.0
        %360 = vmatprep.subr.mxu0 0.0
        %361 = vmatpush1.msra.mxu0 0.0
        %362 = vmatprep.subr.mxu0 0.0
        %363 = vmatpush1.msra.mxu0 0.0
        %364 = vmatprep.subr.mxu0 0.0
        %365 = vmatpush1.msra.mxu0 0.0
        %366 = vmatprep.subr.mxu0 0.0
        %367 = vmatpush1.msra.mxu0 0.0
        %368 = vmatprep.subr.mxu0 0.0
        %369 = vmatpush1.msra.mxu0 0.0
        %370 = vmatprep.subr.mxu0 0.0
        %371 = vmatpush1.msra.mxu0 0.0
        %372 = vmatprep.subr.mxu0 0.0
        %373 = vmatpush1.msra.mxu0 0.0
        %374 = vmatprep.subr.mxu0 0.0
        %375 = vmatpush1.msra.mxu0 0.0
        %376 = vmatprep.subr.mxu0 0.0
        %377 = vmatpush1.msra.mxu0 0.0
        %378 = vmatprep.mubr.f32.mxu0 0.0
        %379 = vmatmul.mubr.f32.gmra.mrb[0].mxu0 %v307
        %v380 = vpop.f32.mrb[0].mxu0
        %v381 = vadd.f32 0.0, %v380
        %v382 = vpop.f32.mrb[0].mxu0
        %v383 = vadd.f32 0.0, %v382
        %384 = vdwg.mxu0
        %s385 = sld [smem:[#allocation6]]
        %v386 = vstv %s385
        %v387 = vadd.f32 %v381, %v386
        %v388 = vadd.f32 %v383, %v386
        %v389 = vxor.u32 %v387, 2147483648
        %v390 = vxor.u32 %v388, 2147483648
        %v391 = vmul.f32 %v389, 1.442695
        %v392 = vpow.pop %v391
        %v393 = vmul.f32 %v390, 1.442695
        %v394 = vpow.pop %v393
        %v395 = vadd.f32 %v392, 1.0
        %v396 = vadd.f32 %v394, 1.0
        %v397 = vrcp.pop %v395
        %v398 = vmul.f32 1.0, %v397
        %v399 = vrcp.pop %v396
        %v400 = vmul.f32 1.0, %v399
        %s401 = sld [smem:[#allocation6 + $0x1]]
        %v402 = vstv %s401
        %v403 = vadd.f32 %v381, %v402
        %v404 = vadd.f32 %v383, %v402
        %v405 = vld [vmem:[%s267] sm:$0xff]
        %v406 = vlaneseq
        %v407 = vshrl.u32 %v406, 7
        %v408 = vsub.s32 0, %v407
        %v409 = vrot.slane %v398, %v408
        %v410 = vlaneseq
        %v411 = vshrl.u32 %v410, 7
        %v412 = vsub.s32 0, %v411
        %v413 = vrot.slane %v400, %v412
        %v415 = vcombine.high %v405, %v405
        %v417 = vmul.f32 %v409, %v405
        %v418 = vmul.f32 %v413, %v415
        %v419 = vlaneseq
        %v420 = vshrl.u32 %v419, 7
        %v421 = vsub.s32 1, %v420
        %v422 = vrot.slane %v403, %v421
        %v423 = vlaneseq
        %v424 = vshrl.u32 %v423, 7
        %v425 = vsub.s32 1, %v424
        %v426 = vrot.slane %v404, %v425
        %v427 = vadd.f32 %v417, %v422
        %v428 = vadd.f32 %v418, %v426
        %v431 = vcombine.low %v427, %v428
        %433 = vst [vmem:[%s297] sm:$0xff] %v431
        %s434 = sand.u32 %s143, 1
        %s435 = scalar_lea.sflag [#allocation4], %s434
        %s436 = sand.u32 %s143, 1
        %s437 = smul.addr %s436, 8
        %s438 = scalar_lea.vmem [#allocation10], %s437
        // Predicated region
        $region53: #{tpu_custom_call.1} parent=35 // pred_check
          %p439 = pneg %p153
        $region54: #{tpu_custom_call.1} parent=35 // pred_check_branch
          %441 = sbr.rel (%p439) target = $region56
        $region55: #{tpu_custom_call.1} parent=35 // pred_region
          %s442 = smul.u32 2, %s28
          %s444 = ssub.s32 128, 128
          %445 = vsyncadd %s435, %s444
          %s446 = smul.addr %s27, 2
          %s447 = sadd.s32 %s442, %s446
          %s448 = smul.addr %s447, 64
          %s449 = scalar_lea.hbm %s4, %s448
          %s451 = sshll.u32 %s438, 4
          %s452 = int_to_ptr.vmem [resolvable:$true] %s451
          %454 = dma.vmem_to_hbm [thread:$0]  %s452, 128, %s449, %s435
        $region56: #{tpu_custom_call.1} parent=35 // pred_fallthru
          _
      $region36: #{tpu_custom_call.1} parent=5 // pred_fallthru
        _
      %p455 = scmp.le.s32.totalorder 2, %s18
      // Predicated region
      $region57: #{tpu_custom_call.1} parent=5 // pred_check
        %p456 = pneg %p455
      $region58: #{tpu_custom_call.1} parent=5 // pred_check_branch
        %458 = sbr.rel (%p456) target = $region60
      $region59: #{tpu_custom_call.1} parent=5 // pred_region
        %s459 = ssub.s32 %s18, 2
        // Predicated region
        $region61: #{tpu_custom_call.1} parent=59 // pred_check
          %p460 = pneg %p159
        $region62: #{tpu_custom_call.1} parent=59 // pred_check_branch
          %462 = sbr.rel (%p460) target = $region64
        $region63: #{tpu_custom_call.1} parent=59 // pred_region
          %s463 = sand.u32 %s144, 1
          %s464 = scalar_lea.sflag [#allocation4], %s463
          %s465 = sand.u32 %s144, 1
          %s466 = smul.addr %s465, 8
          %s467 = scalar_lea.vmem [#allocation10], %s466
          %468 = dma.done %s464, 128
        $region64: #{tpu_custom_call.1} parent=59 // pred_fallthru
          _
      $region60: #{tpu_custom_call.1} parent=5 // pred_fallthru
        _
    $region6: #{tpu_custom_call.1} parent=1 // loop_footer
      %s22 = sadd.s32 1, %s18
    $region7: #{tpu_custom_call.1} parent=1 // loop_footer_branch
      %17 = sbr.rel target = $region3
    $region8: #{tpu_custom_call.1} parent=1 // loop_exit
      _
    %469 = vsyncpa [#allocation3], 1
    %s470 = scalar_lea.sflag [#allocation3], 1
    %471 = vsyncpa %s470, 1
    %472 = vsyncpa [#allocation8], 1
    %s473 = scalar_lea.sflag [#allocation8], 1
    %474 = vsyncpa %s473, 1
    %475 = vsyncpa [#allocation4], 1
    %s476 = scalar_lea.sflag [#allocation4], 1
    %477 = vsyncpa %s476, 1
    %478 = vsyncpa [#allocation5], 1
    %s479 = scalar_lea.sflag [#allocation5], 1
    %480 = vsyncpa %s479, 1

</llo_original>
